<compile_context>
chip_gen: v7x
topology: tpu7x:2x2x1
jax: 0.10.0
libtpu: 0.0.40
codegen_flags: <defaults>
</compile_context>

<pallas_src>
import jax
import jax.numpy as jnp
import numpy as np
from jax.experimental import pallas as pl
from jax.experimental.pallas import tpu as pltpu


def _fused_gemm_bias_relu_kernel(w_ref, x_ref, shift_ref, o_ref):
    # w_ref:     (8*Cout, 8*Cin)  bf16  (BN scale folded in)
    # x_ref:     (8*Cin,  tm)     bf16  (lane-dense activation tile)
    # shift_ref: (8*Cout, 1)      f32   (BN shift per fused output row)
    # o_ref:     (8*Cout, tm)     f32   (lane-dense output tile)
    acc = jnp.dot(w_ref[...], x_ref[...], preferred_element_type=jnp.float32)
    y = acc + shift_ref[...]
    o_ref[...] = jnp.maximum(y, 0.0).astype(o_ref.dtype)


def _pick_tm(m, max_tm=2048):
    """Largest multiple of 128 that divides m, preferring >= 2 grid steps."""
    divisors = [t for t in range(128, min(m, max_tm) + 1, 128) if m % t == 0]
    if not divisors:
        return None
    multi = [t for t in divisors if m // t >= 2]
    return max(multi) if multi else max(divisors)


def _fused_polyphase_gemm(w_big, x_cols_t, shift_big, cout8, cin8):
    """relu(w_big @ x_cols_t + shift_big) -> (8*Cout, M), tiled over M."""
    M = x_cols_t.shape[1]
    tm = _pick_tm(M)
    if tm is None:  # rare fallback: M not a multiple of 128
        tm = min(2048, ((M + 127) // 128) * 128)
        Mp = ((M + tm - 1) // tm) * tm
        x_cols_t = jnp.pad(x_cols_t, ((0, 0), (0, Mp - M)))
    else:
        Mp = M

    out_t = pl.pallas_call(
        _fused_gemm_bias_relu_kernel,
        out_shape=jax.ShapeDtypeStruct((cout8, Mp), jnp.float32),
        grid_spec=pltpu.PrefetchScalarGridSpec(
            num_scalar_prefetch=0,
            grid=(Mp // tm,),
            in_specs=[
                pl.BlockSpec((cout8, cin8), lambda i: (0, 0)),
                pl.BlockSpec((cin8, tm), lambda i: (0, i)),
                pl.BlockSpec((cout8, 1), lambda i: (0, 0)),
            ],
            out_specs=pl.BlockSpec((cout8, tm), lambda i: (0, i)),
        ),
        compiler_params=pltpu.CompilerParams(
            dimension_semantics=("parallel",),
            vmem_limit_bytes=32 * 1024 * 1024,
        ),
        cost_estimate=pl.CostEstimate(
            flops=2 * Mp * cin8 * cout8,
            transcendentals=0,
            bytes_accessed=(cin8 * Mp * 2 + cout8 * cin8 * 2
                            + cout8 * Mp * 4 + cout8 * 4),
        ),
    )(w_big, x_cols_t, shift_big)
    return out_t[:, :M]


# per-dim (input-shift, output-parity) -> kernel tap index for
# ConvTranspose3d(k=3, s=2, p=1, op=1); (shift=1, parity=0) never contributes.
_KMAP = {(0, 0): 1, (0, 1): 2, (1, 1): 0}


def block_transpose_forward(x, weight, gamma, beta, running_mean, running_var,
                            eps=1e-5):
    """Eval-mode BlockTranspose forward.

    x:      (N, Cin, D, H, W)     NCDHW
    weight: (Cin, Cout, 3, 3, 3)  PyTorch ConvTranspose3d layout
    returns (N, Cout, 2D, 2H, 2W) float32
    """
    N, Cin, D, H, W = x.shape
    Cout = weight.shape[1]
    M = N * D * H * W

    # BatchNorm (running-stat / eval) folded into per-channel scale & shift.
    scale = gamma / jnp.sqrt(running_var + eps)                  # (Cout,)
    shift = beta - running_mean * scale                          # (Cout,)

    # --- polyphase weight: rows (co, pd, ph, pw), cols (sd, sh, sw, ci) ---
    w_big = jnp.zeros((Cout, 8, 8, Cin), dtype=jnp.float32)
    for pd in (0, 1):
        for ph in (0, 1):
            for pw in (0, 1):
                p_idx = pd * 4 + ph * 2 + pw
                for sd in (0, 1):
                    for sh in (0, 1):
                        for sw in (0, 1):
                            kd = _KMAP.get((sd, pd))
                            kh = _KMAP.get((sh, ph))
                            kw = _KMAP.get((sw, pw))
                            if kd is None or kh is None or kw is None:
                                continue
                            s_idx = sd * 4 + sh * 2 + sw
                            w_big = w_big.at[:, p_idx, s_idx, :].set(
                                weight[:, :, kd, kh, kw].T)
    w_big = w_big * scale[:, None, None, None]                   # fold BN scale
    w_big = w_big.reshape(8 * Cout, 8 * Cin).astype(jnp.bfloat16)
    shift_big = jnp.repeat(shift, 8).reshape(8 * Cout, 1).astype(jnp.float32)

    # --- lane-dense activation: rows (sd, sh, sw, ci), cols (n, d, h, w) ---
    xp = jnp.pad(x, ((0, 0), (0, 0), (0, 1), (0, 1), (0, 1)))    # zero far edge
    xp = jnp.transpose(xp, (1, 0, 2, 3, 4))                      # (Cin,N,D+1,H+1,W+1)
    slabs = [xp[:, :, sd:sd + D, sh:sh + H, sw:sw + W]
             for sd in (0, 1) for sh in (0, 1) for sw in (0, 1)]
    x_cols_t = (jnp.stack(slabs, axis=0)                         # (8,Cin,N,D,H,W)
                .reshape(8 * Cin, M).astype(jnp.bfloat16))

    # --- fused GEMM + BN shift + ReLU on TPU (Pallas) ---
    out_t = _fused_polyphase_gemm(w_big, x_cols_t, shift_big, 8 * Cout, 8 * Cin)

    # Dropout(p=0.25) is identity in eval mode.

    # --- pixel shuffle back to NCDHW ---
    out = out_t.reshape(Cout, 2, 2, 2, N, D, H, W)
    out = jnp.transpose(out, (4, 0, 5, 1, 6, 2, 7, 3))           # (N,Cout,D,2,H,2,W,2)
    return out.reshape(N, Cout, 2 * D, 2 * H, 2 * W)


def _reference(x, weight, gamma, beta, running_mean, running_var, eps=1e-5):
    """Pure-JAX (f32) reference for the same forward pass."""
    Cout = weight.shape[1]
    w_conv = jnp.transpose(weight[:, :, ::-1, ::-1, ::-1], (1, 0, 2, 3, 4))
    y = jax.lax.conv_general_dilated(
        x, w_conv,
        window_strides=(1, 1, 1),
        padding=[(1, 2), (1, 2), (1, 2)],
        lhs_dilation=(2, 2, 2),
        dimension_numbers=("NCDHW", "OIDHW", "NCDHW"))
    scale = (gamma / jnp.sqrt(running_var + eps)).reshape(1, Cout, 1, 1, 1)
    shift = (beta - running_mean * gamma / jnp.sqrt(running_var + eps)).reshape(
        1, Cout, 1, 1, 1)
    return jnp.maximum(y * scale + shift, 0.0)


if __name__ == "__main__":
    key = jax.random.PRNGKey(0)
    k_x, k_w, k_g, k_b, k_m, k_v = jax.random.split(key, 6)

    N, Cin, Cout, D, H, W = 2, 4, 8, 8, 8, 8
    x = jax.random.normal(k_x, (N, Cin, D, H, W), dtype=jnp.float32)

    weight = 0.1 * jax.random.normal(k_w, (Cin, Cout, 3, 3, 3), dtype=jnp.float32)
    gamma = 0.5 + jax.random.uniform(k_g, (Cout,), dtype=jnp.float32)
    beta = 0.1 * jax.random.normal(k_b, (Cout,), dtype=jnp.float32)
    running_mean = 0.1 * jax.random.normal(k_m, (Cout,), dtype=jnp.float32)
    running_var = 0.5 + jax.random.uniform(k_v, (Cout,), dtype=jnp.float32)

    fwd = jax.jit(block_transpose_forward)
    out = jax.block_until_ready(
        fwd(x, weight, gamma, beta, running_mean, running_var))

    ref = jax.block_until_ready(
        _reference(x, weight, gamma, beta, running_mean, running_var))

    assert out.shape == (N, Cout, 2 * D, 2 * H, 2 * W), out.shape
    # bf16 matmul operands (f32 accumulate) -> looser tolerance than pure f32.
    np.testing.assert_allclose(np.asarray(out), np.asarray(ref),
                               rtol=3e-2, atol=3e-2)
    print("KERNEL_OK")
</pallas_src>

<mosaic_0001>
module attributes {stable_mosaic.version = 11 : i64} {
  func.func @_fused_gemm_bias_relu_kernel(%arg0: i32, %arg1: memref<64x32xbf16, #tpu.memory_space<vmem>>, %arg2: memref<32x512xbf16, #tpu.memory_space<vmem>>, %arg3: memref<64x1xf32, #tpu.memory_space<vmem>>, %arg4: memref<64x512xf32, #tpu.memory_space<vmem>>) attributes {dimension_semantics = [#tpu.dimension_semantics<parallel>], iteration_bounds = array<i64: 2>, scalar_prefetch = 0 : i64, scratch_operands = 0 : i64, tpu.core_type = #tpu.core_type<tc>, window_params = [{pipeline_mode = #tpu.pipeline_mode<synchronous>, transform_indices = @transform_0, window_bounds = array<i64: 64, 32>}, {transform_indices = @transform_1, window_bounds = array<i64: 32, 512>}, {pipeline_mode = #tpu.pipeline_mode<synchronous>, transform_indices = @transform_2, window_bounds = array<i64: 64, 1>}, {transform_indices = @transform_3, window_bounds = array<i64: 64, 512>}]} {
    %c0 = arith.constant 0 : index
    %c0_0 = arith.constant 0 : index
    %0 = vector.load %arg1[%c0, %c0_0] : memref<64x32xbf16, #tpu.memory_space<vmem>>, vector<64x32xbf16>
    %c0_1 = arith.constant 0 : index
    %c0_2 = arith.constant 0 : index
    %1 = vector.load %arg2[%c0_1, %c0_2] : memref<32x512xbf16, #tpu.memory_space<vmem>>, vector<32x512xbf16>
    %cst = arith.constant dense<0.000000e+00> : vector<64x512xf32>
    %2 = tpu.matmul %0, %1, %cst {dimension_numbers = #tpu.dot_dimension_numbers<[1], [0], [0], [1], [0, 0, 1, 1], [], []>} : vector<64x32xbf16>, vector<32x512xbf16>, vector<64x512xf32> -> vector<64x512xf32>
    %c0_3 = arith.constant 0 : index
    %c0_4 = arith.constant 0 : index
    %3 = vector.load %arg3[%c0_3, %c0_4] : memref<64x1xf32, #tpu.memory_space<vmem>>, vector<64x1xf32>
    %4 = vector.broadcast %3 : vector<64x1xf32> to vector<64x512xf32>
    %5 = arith.addf %2, %4 : vector<64x512xf32>
    %cst_5 = arith.constant 0.000000e+00 : f32
    %6 = vector.broadcast %cst_5 : f32 to vector<64x512xf32>
    %7 = arith.maximumf %5, %6 : vector<64x512xf32>
    %c0_6 = arith.constant 0 : index
    %c0_7 = arith.constant 0 : index
    %8 = vector.load %arg4[%c0_6, %c0_7] : memref<64x512xf32, #tpu.memory_space<vmem>>, vector<64x512xf32>
    tpu.vector_store %arg4[%c0_6, %c0_7], %7 {strides = array<i32>} : memref<64x512xf32, #tpu.memory_space<vmem>>, vector<64x512xf32>,
    return
  }
  func.func @transform_0(%arg0: i32) -> (i32, i32) {
    %c0_i32 = arith.constant 0 : i32
    %c0_i32_0 = arith.constant 0 : i32
    %c0_i32_1 = arith.constant 0 : i32
    return %c0_i32, %c0_i32_0 : i32, i32
  }
  func.func @transform_1(%arg0: i32) -> (i32, i32) {
    %c0_i32 = arith.constant 0 : i32
    %c0_i32_0 = arith.constant 0 : i32
    return %c0_i32, %arg0 : i32, i32
  }
  func.func @transform_2(%arg0: i32) -> (i32, i32) {
    %c0_i32 = arith.constant 0 : i32
    %c0_i32_0 = arith.constant 0 : i32
    %c0_i32_1 = arith.constant 0 : i32
    return %c0_i32, %c0_i32_0 : i32, i32
  }
  func.func @transform_3(%arg0: i32) -> (i32, i32) {
    %c0_i32 = arith.constant 0 : i32
    %c0_i32_0 = arith.constant 0 : i32
    return %c0_i32, %arg0 : i32, i32
  }
}

</mosaic_0001>

<llo_original>
// kernel: block_transpose_forward.1
$region0: #{block_transpose_forward.1}
  #allocation0 [shape = 'u32[]', space=smem, size = 0x4, offset = 0x4, fixed_abs, tag = 'smem constant byte address 0x4 - core index']
  #allocation1 [shape = 'u32[144,128]{1,0:T(1,128)}', space=vmem, size = 0x12000, scoped, tag = 'internal scratch']
  %s0 = inlined_call_operand.vmem [shape: bf16[64,32], index: 0, kind: input, shape index: {}]
  %s1 = inlined_call_operand.vmem [shape: bf16[32,1024], index: 1, kind: input, shape index: {}]
  %s2 = inlined_call_operand.vmem [shape: f32[64,1], index: 2, kind: input, shape index: {}]
  %s3 = inlined_call_operand.vmem [shape: f32[64,1024], index: 3, kind: output, shape index: {}]
  %s4 = sld [smem:[#allocation0]]
  $region87: #{block_transpose_forward.1} parent=0
    _
  %s6 = ssub.s32 1, %s4
  %s7 = scalar_select 0, %s6, %s4
  $region1: #{block_transpose_forward.1} parent=0
    #allocation2 [shape = 'u8[65536]{0}', space=vmem, size = 0x10000, scoped, tag = 'input window, operand 1']
    #allocation3 [shape = 'u8[262144]{0}', space=vmem, size = 0x40000, scoped, tag = 'output window, operand 0']
    loop: start=0, step=1, limit=4
    $region2: #{block_transpose_forward.1} parent=1 // loop_pre_header
      _
    $region3: #{block_transpose_forward.1} parent=1 // loop_header
      %s9 = sphi 0, %s13
      %p10 = scmp.ge.s32.totalorder %s9, 4
      %s17 = sphi 0, %s17
      %s19 = sphi 0, %s17
      %s20 = sphi 0, %s19
      %s34 = sphi 0, %s20
      %s40 = sphi 0, %s42
      %s43 = sphi 0, %s40
      %s44 = sphi 0, %s43
      %s60 = sphi 0, %s44
      %s64 = sphi 0, %s64
      %s66 = sphi 0, %s64
      %s67 = sphi 0, %s66
      %s81 = sphi 0, %s67
      %s87 = sphi 0, %s89
      %s90 = sphi 0, %s87
      %s91 = sphi 0, %s90
      %s107 = sphi 0, %s91
    $region4: #{block_transpose_forward.1} parent=1 // loop_header_branch
      %12 = sbr.rel (%p10) target = $region8
    $region5: #{block_transpose_forward.1} parent=1 // loop_body
      %s14 = ssub.s32 %s9, 1
      %s15 = ssub.s32 %s9, 2
      %s16 = sadd.s32 %s9, 1
      %s18 = sadd.s32 %s17, 1
      %p21 = scmp.eq.s32.totalorder %s9, 1
      %p22 = scmp.ne.s32.totalorder %s17, %s19
      %p23 = scmp.eq.s32.totalorder %s9, 0
      %p24 = por %p22, %p23
      %p25 = scmp.ne.s32.totalorder %s17, %s19
      %p26 = scmp.eq.s32.totalorder %s14, 1
      %p27 = por %p25, %p26
      %p28 = scmp.ne.s32.totalorder %s19, %s20
      %p29 = scmp.eq.s32.totalorder %s14, 0
      %p30 = por %p28, %p29
      %p31 = scmp.ne.s32.totalorder %s19, %s20
      %p32 = scmp.eq.s32.totalorder %s15, 1
      %p33 = por %p31, %p32
      %p35 = scmp.ne.s32.totalorder %s20, %s34
      %p36 = scmp.eq.s32.totalorder %s15, 0
      %p37 = por %p35, %p36
      %s38 = ssub.s32 %s9, %s16
      %p39 = scmp.eq.s32.totalorder %s38, 0
      %s41 = sadd.s32 %s40, 1
      %s42 = scalar_select %p39, %s40, %s41
      %p45 = pneg %p39
      %p46 = scmp.eq.s32.totalorder %s9, 1
      %p47 = por %p45, %p46
      %p48 = scmp.ne.s32.totalorder %s40, %s43
      %p49 = scmp.eq.s32.totalorder %s9, 0
      %p50 = por %p48, %p49
      %p51 = scmp.ne.s32.totalorder %s40, %s43
      %p52 = scmp.eq.s32.totalorder %s14, 1
      %p53 = por %p51, %p52
      %p54 = scmp.ne.s32.totalorder %s43, %s44
      %p55 = scmp.eq.s32.totalorder %s14, 0
      %p56 = por %p54, %p55
      %p57 = scmp.ne.s32.totalorder %s43, %s44
      %p58 = scmp.eq.s32.totalorder %s15, 1
      %p59 = por %p57, %p58
      %p61 = scmp.ne.s32.totalorder %s44, %s60
      %p62 = scmp.eq.s32.totalorder %s15, 0
      %p63 = por %p61, %p62
      %s65 = sadd.s32 %s64, 1
      %p68 = scmp.eq.s32.totalorder %s9, 1
      %p69 = scmp.ne.s32.totalorder %s64, %s66
      %p70 = scmp.eq.s32.totalorder %s9, 0
      %p71 = por %p69, %p70
      %p72 = scmp.ne.s32.totalorder %s64, %s66
      %p73 = scmp.eq.s32.totalorder %s14, 1
      %p74 = por %p72, %p73
      %p75 = scmp.ne.s32.totalorder %s66, %s67
      %p76 = scmp.eq.s32.totalorder %s14, 0
      %p77 = por %p75, %p76
      %p78 = scmp.ne.s32.totalorder %s66, %s67
      %p79 = scmp.eq.s32.totalorder %s15, 1
      %p80 = por %p78, %p79
      %p82 = scmp.ne.s32.totalorder %s67, %s81
      %p83 = scmp.eq.s32.totalorder %s15, 0
      %p84 = por %p82, %p83
      %s85 = ssub.s32 %s9, %s16
      %p86 = scmp.eq.s32.totalorder %s85, 0
      %s88 = sadd.s32 %s87, 1
      %s89 = scalar_select %p86, %s87, %s88
      %p92 = pneg %p86
      %p93 = scmp.eq.s32.totalorder %s9, 1
      %p94 = por %p92, %p93
      %p95 = scmp.ne.s32.totalorder %s87, %s90
      %p96 = scmp.eq.s32.totalorder %s9, 0
      %p97 = por %p95, %p96
      %p98 = scmp.ne.s32.totalorder %s87, %s90
      %p99 = scmp.eq.s32.totalorder %s14, 1
      %p100 = por %p98, %p99
      %p101 = scmp.ne.s32.totalorder %s90, %s91
      %p102 = scmp.eq.s32.totalorder %s14, 0
      %p103 = por %p101, %p102
      %p104 = scmp.ne.s32.totalorder %s90, %s91
      %p105 = scmp.eq.s32.totalorder %s15, 1
      %p106 = por %p104, %p105
      %p108 = scmp.ne.s32.totalorder %s91, %s107
      %p109 = scmp.eq.s32.totalorder %s15, 0
      %p110 = por %p108, %p109
      %p111 = scmp.le.s32.totalorder 1, %s9
      %p112 = scmp.lt.s32.totalorder %s9, 3
      %p113 = pnand %p111, %p112
      %p114 = pneg %p113
      // Predicated region
      $region9: #{block_transpose_forward.1} parent=5 // pred_check
        _
      $region10: #{block_transpose_forward.1} parent=5 // pred_check_branch
        %116 = sbr.rel (%p113) target = $region12
      $region11: #{block_transpose_forward.1} parent=5 // pred_region
        %s117 = ssub.s32 %s9, 1
        // Predicated region
        $region13: #{block_transpose_forward.1} parent=11 // pred_check
          %p118 = pneg %p30
        $region14: #{block_transpose_forward.1} parent=11 // pred_check_branch
          %120 = sbr.rel (%p118) target = $region16
        $region15: #{block_transpose_forward.1} parent=11 // pred_region
          _
        $region16: #{block_transpose_forward.1} parent=11 // pred_fallthru
          _
        // Predicated region
        $region17: #{block_transpose_forward.1} parent=11 // pred_check
          %p121 = pneg %p77
        $region18: #{block_transpose_forward.1} parent=11 // pred_check_branch
          %123 = sbr.rel (%p121) target = $region20
        $region19: #{block_transpose_forward.1} parent=11 // pred_region
          _
        $region20: #{block_transpose_forward.1} parent=11 // pred_fallthru
          _
      $region12: #{block_transpose_forward.1} parent=5 // pred_fallthru
        _
      %p124 = scmp.lt.s32.totalorder %s9, 2
      // Predicated region
      $region21: #{block_transpose_forward.1} parent=5 // pred_check
        %p125 = pneg %p124
      $region22: #{block_transpose_forward.1} parent=5 // pred_check_branch
        %127 = sbr.rel (%p125) target = $region24
      $region23: #{block_transpose_forward.1} parent=5 // pred_region
        // Predicated region
        $region25: #{block_transpose_forward.1} parent=23 // pred_check
          %p128 = pneg %p50
        $region26: #{block_transpose_forward.1} parent=23 // pred_check_branch
          %130 = sbr.rel (%p128) target = $region28
        $region27: #{block_transpose_forward.1} parent=23 // pred_region
          %s131 = sand.u32 %s40, 1
          %s132 = sand.u32 %s40, 1
          %s133 = smul.addr %s132, 64
          %s134 = scalar_lea.vmem [#allocation2], %s133
          %s135 = smul.u32 4, %s9
          %s136 = smul.addr %s135, 4
          %s137 = scalar_lea.vmem %s1, %s136
          // Predicated region
          $region29: #{block_transpose_forward.1} parent=27 // pred_check
            _
          $region30: #{block_transpose_forward.1} parent=27 // pred_check_branch
            %139 = sbr.rel (0) target = $region32
          $region31: #{block_transpose_forward.1} parent=27 // pred_region
            // Predicated region
            $region33: #{block_transpose_forward.1} parent=31 // pred_check
              _
            $region34: #{block_transpose_forward.1} parent=31 // pred_check_branch
              %141 = sbr.rel (0) target = $region36
            $region35: #{block_transpose_forward.1} parent=31 // pred_region
              loop: start=0, step=1, limit=1
              $region37: #{block_transpose_forward.1} parent=35 // loop_pre_header
                _
              $region38: #{block_transpose_forward.1} parent=35 // loop_header
                %s143 = sphi 0, %s147
                %p144 = scmp.ge.s32.totalorder %s143, 1
                %s148 = sphi %s137, %s137
                %s149 = sphi %s134, %s134
              $region39: #{block_transpose_forward.1} parent=35 // loop_header_branch
                %146 = sbr.rel (%p144) target = $region43
              $region40: #{block_transpose_forward.1} parent=35 // loop_body
                %v150 = vld [vmem:[%s148] sm:$0xff]
                %151 = vst [vmem:[%s149] sm:$0xff] %v150
                %v152 = vld [vmem:[%s148 + $0x8] sm:$0xff]
                %153 = vst [vmem:[%s149 + $0x8] sm:$0xff] %v152
                %v154 = vld [vmem:[%s148 + $0x20] sm:$0xff]
                %155 = vst [vmem:[%s149 + $0x10] sm:$0xff] %v154
                %v156 = vld [vmem:[%s148 + $0x28] sm:$0xff]
                %157 = vst [vmem:[%s149 + $0x18] sm:$0xff] %v156
                %v158 = vld [vmem:[%s148 + $0x40] sm:$0xff]
                %159 = vst [vmem:[%s149 + $0x20] sm:$0xff] %v158
                %v160 = vld [vmem:[%s148 + $0x48] sm:$0xff]
                %161 = vst [vmem:[%s149 + $0x28] sm:$0xff] %v160
                %v162 = vld [vmem:[%s148 + $0x60] sm:$0xff]
                %163 = vst [vmem:[%s149 + $0x30] sm:$0xff] %v162
                %v164 = vld [vmem:[%s148 + $0x68] sm:$0xff]
                %165 = vst [vmem:[%s149 + $0x38] sm:$0xff] %v164
              $region41: #{block_transpose_forward.1} parent=35 // loop_footer
                %s147 = sadd.s32 1, %s143
              $region42: #{block_transpose_forward.1} parent=35 // loop_footer_branch
                %142 = sbr.rel target = $region38
              $region43: #{block_transpose_forward.1} parent=35 // loop_exit
                _
            $region36: #{block_transpose_forward.1} parent=31 // pred_fallthru
              _
            // Predicated region
            $region44: #{block_transpose_forward.1} parent=31 // pred_check
              _
            $region45: #{block_transpose_forward.1} parent=31 // pred_check_branch
              %167 = sbr.rel target = $region47
            $region46: #{block_transpose_forward.1} parent=31 // pred_region
              _
            $region47: #{block_transpose_forward.1} parent=31 // pred_fallthru
              _
          $region32: #{block_transpose_forward.1} parent=27 // pred_fallthru
            _
          %168 = vnop
        $region28: #{block_transpose_forward.1} parent=23 // pred_fallthru
          _
      $region24: #{block_transpose_forward.1} parent=5 // pred_fallthru
        _
      %p169 = scmp.le.s32.totalorder 1, %s9
      %p170 = scmp.lt.s32.totalorder %s9, 3
      %p171 = pnand %p169, %p170
      %p172 = pneg %p171
      // Predicated region
      $region48: #{block_transpose_forward.1} parent=5 // pred_check
        _
      $region49: #{block_transpose_forward.1} parent=5 // pred_check_branch
        %174 = sbr.rel (%p171) target = $region51
      $region50: #{block_transpose_forward.1} parent=5 // pred_region
        %s175 = ssub.s32 %s9, 1
        %s176 = sand.u32 %s43, 1
        %s177 = sand.u32 %s43, 1
        %s178 = smul.addr %s177, 64
        %s179 = scalar_lea.vmem [#allocation2], %s178
        // Predicated region
        $region52: #{block_transpose_forward.1} parent=50 // pred_check
          %p180 = pneg %p56
        $region53: #{block_transpose_forward.1} parent=50 // pred_check_branch
          %182 = sbr.rel (%p180) target = $region55
        $region54: #{block_transpose_forward.1} parent=50 // pred_region
          _
        $region55: #{block_transpose_forward.1} parent=50 // pred_fallthru
          _
        %p183 = pneg %p30
        %p184 = pneg %p27
        %s185 = sand.u32 %s43, 1
        %s186 = sand.u32 %s43, 1
        %s187 = smul.addr %s186, 64
        %s188 = scalar_lea.vmem [#allocation2], %s187
        %p189 = pneg %p56
        %p190 = pneg %p53
        %p191 = pneg %p77
        %p192 = pneg %p74
        %p193 = pneg %p103
        %p194 = pneg %p100
        %s195 = sand.u32 %s90, 1
        %s196 = sand.u32 %s90, 1
        %s197 = smul.addr %s196, 256
        %s198 = scalar_lea.vmem [#allocation3], %s197
        %s199 = smul.u32 4, %s14
        %s200 = smul.u32 4, %s14
        %v202 = vld [vmem:[%s0] sm:$0xf]
        %v203 = vld [vmem:[%s0 + $0x4] sm:$0xf]
        %v204 = vld [vmem:[%s0 + $0x8] sm:$0xf]
        %v205 = vld [vmem:[%s0 + $0xc] sm:$0xf]
        %v206 = vld [vmem:[%s0 + $0x10] sm:$0xf]
        %v207 = vld [vmem:[%s0 + $0x14] sm:$0xf]
        %v208 = vld [vmem:[%s0 + $0x18] sm:$0xf]
        %v209 = vld [vmem:[%s0 + $0x1c] sm:$0xf]
        %v210 = vld [vmem:[%s179] sm:$0xff]
        %v211 = vld [vmem:[%s179 + $0x8] sm:$0xff]
        %v212 = vld [vmem:[%s179 + $0x10] sm:$0xff]
        %v213 = vld [vmem:[%s179 + $0x18] sm:$0xff]
        %v214 = vld [vmem:[%s179 + $0x20] sm:$0xff]
        %v215 = vld [vmem:[%s179 + $0x28] sm:$0xff]
        %v216 = vld [vmem:[%s179 + $0x30] sm:$0xff]
        %v217 = vld [vmem:[%s179 + $0x38] sm:$0xff]
        %v218 = vld [vmem:[%s2] sm:$0xff]
        %v219 = vld [vmem:[%s2 + $0x8] sm:$0xff]
        %v220 = vld [vmem:[%s2 + $0x10] sm:$0xff]
        %v221 = vld [vmem:[%s2 + $0x18] sm:$0xff]
        %v222 = vld [vmem:[%s2 + $0x20] sm:$0xff]
        %v223 = vld [vmem:[%s2 + $0x28] sm:$0xff]
        %v224 = vld [vmem:[%s2 + $0x30] sm:$0xff]
        %v225 = vld [vmem:[%s2 + $0x38] sm:$0xff]
        %227 = vset.pattern.permute.xlu0 0
        %228 = vperm.xlu0 %227, %v218
        %v229 = vpop.permute.xlu0 %228
        %232 = vset.pattern.permute.xlu0 0
        %233 = vperm.xlu0 %232, %v219
        %v234 = vpop.permute.xlu0 %233
        %237 = vset.pattern.permute.xlu0 0
        %238 = vperm.xlu0 %237, %v220
        %v239 = vpop.permute.xlu0 %238
        %242 = vset.pattern.permute.xlu0 0
        %243 = vperm.xlu0 %242, %v221
        %v244 = vpop.permute.xlu0 %243
        %247 = vset.pattern.permute.xlu0 0
        %248 = vperm.xlu0 %247, %v222
        %v249 = vpop.permute.xlu0 %248
        %252 = vset.pattern.permute.xlu0 0
        %253 = vperm.xlu0 %252, %v223
        %v254 = vpop.permute.xlu0 %253
        %257 = vset.pattern.permute.xlu0 0
        %258 = vperm.xlu0 %257, %v224
        %v259 = vpop.permute.xlu0 %258
        %262 = vset.pattern.permute.xlu0 0
        %263 = vperm.xlu0 %262, %v225
        %v264 = vpop.permute.xlu0 %263
        %v274 = vunpack.c.l.b16 %v202
        %v275 = vunpack.c.l.b16 %v203
        %v276 = vunpack.c.l.b16 %v204
        %v277 = vunpack.c.l.b16 %v205
        %v278 = vunpack.c.l.b16 %v206
        %v279 = vunpack.c.l.b16 %v207
        %v280 = vunpack.c.l.b16 %v208
        %v281 = vunpack.c.l.b16 %v209
        %v282 = vpack.c.b16 %v275, %v274
        %v283 = vpack.c.b16 %v277, %v276
        %v284 = vpack.c.b16 %v279, %v278
        %v285 = vpack.c.b16 %v281, %v280
        %v294 = vunpack.c.l.b16 %v210
        %v295 = vunpack.c.h.b16 %v210
        %v296 = vunpack.c.l.b16 %v211
        %v297 = vunpack.c.h.b16 %v211
        %v298 = vunpack.c.l.b16 %v212
        %v299 = vunpack.c.h.b16 %v212
        %v300 = vunpack.c.l.b16 %v213
        %v301 = vunpack.c.h.b16 %v213
        %v302 = vunpack.c.l.b16 %v214
        %v303 = vunpack.c.h.b16 %v214
        %v304 = vunpack.c.l.b16 %v215
        %v305 = vunpack.c.h.b16 %v215
        %v306 = vunpack.c.l.b16 %v216
        %v307 = vunpack.c.h.b16 %v216
        %v308 = vunpack.c.l.b16 %v217
        %v309 = vunpack.c.h.b16 %v217
        %v310 = vpack.c.b16 %v298, %v294
        %v311 = vpack.c.b16 %v299, %v295
        %v312 = vpack.c.b16 %v300, %v296
        %v313 = vpack.c.b16 %v301, %v297
        %v314 = vpack.c.b16 %v306, %v302
        %v315 = vpack.c.b16 %v307, %v303
        %v316 = vpack.c.b16 %v308, %v304
        %v317 = vpack.c.b16 %v309, %v305
        %vm326 = vcmask 261120
        %v328 = vsel %vm326, %v282, 0
        %v331 = vsel %vm326, %v283, 0
        %v334 = vsel %vm326, %v284, 0
        %v337 = vsel %vm326, %v285, 0
        %339 = vmatprep.subr.bf16.mxu0 %v311
        %340 = vmatpush1.bf16.msra.mxu0 %v310
        %341 = vmatprep.subr.bf16.mxu0 %v315
        %342 = vmatpush1.bf16.msra.mxu0 %v314
        %343 = vmatprep.subr.bf16.mxu0 0
        %344 = vmatpush1.bf16.msra.mxu0 0
        %345 = vmatprep.subr.bf16.mxu0 0
        %346 = vmatpush1.bf16.msra.mxu0 0
        %347 = vmatprep.subr.bf16.mxu0 0
        %348 = vmatpush1.bf16.msra.mxu0 0
        %349 = vmatprep.subr.bf16.mxu0 0
        %350 = vmatpush1.bf16.msra.mxu0 0
        %351 = vmatprep.subr.bf16.mxu0 0
        %352 = vmatpush1.bf16.msra.mxu0 0
        %353 = vmatprep.subr.bf16.mxu0 0
        %354 = vmatpush1.bf16.msra.mxu0 0
        %355 = vmatprep.subr.bf16.mxu0 0
        %356 = vmatpush1.bf16.msra.mxu0 0
        %357 = vmatprep.subr.bf16.mxu0 0
        %358 = vmatpush1.bf16.msra.mxu0 0
        %359 = vmatprep.subr.bf16.mxu0 0
        %360 = vmatpush1.bf16.msra.mxu0 0
        %361 = vmatprep.subr.bf16.mxu0 0
        %362 = vmatpush1.bf16.msra.mxu0 0
        %363 = vmatprep.subr.bf16.mxu0 0
        %364 = vmatpush1.bf16.msra.mxu0 0
        %365 = vmatprep.subr.bf16.mxu0 0
        %366 = vmatpush1.bf16.msra.mxu0 0
        %367 = vmatprep.subr.bf16.mxu0 0
        %368 = vmatpush1.bf16.msra.mxu0 0
        %369 = vmatprep.subr.bf16.mxu0 0
        %370 = vmatpush1.bf16.msra.mxu0 0
        %371 = vmatprep.mubr.bf16.mxu0 0
        %372 = vmatmul.mubr.bf16.gmra.mrb[0].mxu0 %v328
        %v373 = vpop.f32.mrb[0].mxu0
        %v374 = vadd.f32 %v229, %v373
        %v375 = vpop.f32.mrb[0].mxu0
        %v376 = vadd.f32 %v229, %v375
        %v377 = vpop.f32.mrb[0].mxu0
        %v378 = vadd.f32 %v234, %v377
        %v379 = vpop.f32.mrb[0].mxu0
        %v380 = vadd.f32 %v234, %v379
        %381 = vmatprep.mubr.bf16.mxu0 0
        %382 = vmatmul.mubr.bf16.gmra.mrb[0].mxu0 %v331
        %v383 = vpop.f32.mrb[0].mxu0
        %v384 = vadd.f32 %v239, %v383
        %v385 = vpop.f32.mrb[0].mxu0
        %v386 = vadd.f32 %v239, %v385
        %v387 = vpop.f32.mrb[0].mxu0
        %v388 = vadd.f32 %v244, %v387
        %v389 = vpop.f32.mrb[0].mxu0
        %v390 = vadd.f32 %v244, %v389
        %391 = vmatprep.mubr.bf16.mxu0 0
        %392 = vmatmul.mubr.bf16.gmra.mrb[0].mxu0 %v334
        %v393 = vpop.f32.mrb[0].mxu0
        %v394 = vadd.f32 %v249, %v393
        %v395 = vpop.f32.mrb[0].mxu0
        %v396 = vadd.f32 %v249, %v395
        %v397 = vpop.f32.mrb[0].mxu0
        %v398 = vadd.f32 %v254, %v397
        %v399 = vpop.f32.mrb[0].mxu0
        %v400 = vadd.f32 %v254, %v399
        %401 = vmatprep.mubr.bf16.mxu0 0
        %402 = vmatmul.mubr.bf16.gmra.mrb[0].mxu0 %v337
        %v403 = vpop.f32.mrb[0].mxu0
        %v404 = vadd.f32 %v259, %v403
        %v405 = vpop.f32.mrb[0].mxu0
        %v406 = vadd.f32 %v259, %v405
        %v407 = vpop.f32.mrb[0].mxu0
        %v408 = vadd.f32 %v264, %v407
        %v409 = vpop.f32.mrb[0].mxu0
        %v410 = vadd.f32 %v264, %v409
        %411 = vdwg.mxu0
        %412 = vmatprep.subr.bf16.mxu0 %v313
        %413 = vmatpush1.bf16.msra.mxu0 %v312
        %414 = vmatprep.subr.bf16.mxu0 %v317
        %415 = vmatpush1.bf16.msra.mxu0 %v316
        %416 = vmatprep.subr.bf16.mxu0 0
        %417 = vmatpush1.bf16.msra.mxu0 0
        %418 = vmatprep.subr.bf16.mxu0 0
        %419 = vmatpush1.bf16.msra.mxu0 0
        %420 = vmatprep.subr.bf16.mxu0 0
        %421 = vmatpush1.bf16.msra.mxu0 0
        %422 = vmatprep.subr.bf16.mxu0 0
        %423 = vmatpush1.bf16.msra.mxu0 0
        %424 = vmatprep.subr.bf16.mxu0 0
        %425 = vmatpush1.bf16.msra.mxu0 0
        %426 = vmatprep.subr.bf16.mxu0 0
        %427 = vmatpush1.bf16.msra.mxu0 0
        %428 = vmatprep.subr.bf16.mxu0 0
        %429 = vmatpush1.bf16.msra.mxu0 0
        %430 = vmatprep.subr.bf16.mxu0 0
        %431 = vmatpush1.bf16.msra.mxu0 0
        %432 = vmatprep.subr.bf16.mxu0 0
        %433 = vmatpush1.bf16.msra.mxu0 0
        %434 = vmatprep.subr.bf16.mxu0 0
        %435 = vmatpush1.bf16.msra.mxu0 0
        %436 = vmatprep.subr.bf16.mxu0 0
        %437 = vmatpush1.bf16.msra.mxu0 0
        %438 = vmatprep.subr.bf16.mxu0 0
        %439 = vmatpush1.bf16.msra.mxu0 0
        %440 = vmatprep.subr.bf16.mxu0 0
        %441 = vmatpush1.bf16.msra.mxu0 0
        %442 = vmatprep.subr.bf16.mxu0 0
        %443 = vmatpush1.bf16.msra.mxu0 0
        %444 = vmatprep.mubr.bf16.mxu0 0
        %445 = vmatmul.mubr.bf16.gmra.mrb[0].mxu0 %v328
        %v446 = vpop.f32.mrb[0].mxu0
        %v447 = vadd.f32 %v229, %v446
        %v448 = vpop.f32.mrb[0].mxu0
        %v449 = vadd.f32 %v229, %v448
        %v450 = vpop.f32.mrb[0].mxu0
        %v451 = vadd.f32 %v234, %v450
        %v452 = vpop.f32.mrb[0].mxu0
        %v453 = vadd.f32 %v234, %v452
        %454 = vmatprep.mubr.bf16.mxu0 0
        %455 = vmatmul.mubr.bf16.gmra.mrb[0].mxu0 %v331
        %v456 = vpop.f32.mrb[0].mxu0
        %v457 = vadd.f32 %v239, %v456
        %v458 = vpop.f32.mrb[0].mxu0
        %v459 = vadd.f32 %v239, %v458
        %v460 = vpop.f32.mrb[0].mxu0
        %v461 = vadd.f32 %v244, %v460
        %v462 = vpop.f32.mrb[0].mxu0
        %v463 = vadd.f32 %v244, %v462
        %464 = vmatprep.mubr.bf16.mxu0 0
        %465 = vmatmul.mubr.bf16.gmra.mrb[0].mxu0 %v334
        %v466 = vpop.f32.mrb[0].mxu0
        %v467 = vadd.f32 %v249, %v466
        %v468 = vpop.f32.mrb[0].mxu0
        %v469 = vadd.f32 %v249, %v468
        %v470 = vpop.f32.mrb[0].mxu0
        %v471 = vadd.f32 %v254, %v470
        %v472 = vpop.f32.mrb[0].mxu0
        %v473 = vadd.f32 %v254, %v472
        %474 = vmatprep.mubr.bf16.mxu0 0
        %475 = vmatmul.mubr.bf16.gmra.mrb[0].mxu0 %v337
        %v476 = vpop.f32.mrb[0].mxu0
        %v477 = vadd.f32 %v259, %v476
        %v478 = vpop.f32.mrb[0].mxu0
        %v479 = vadd.f32 %v259, %v478
        %v480 = vpop.f32.mrb[0].mxu0
        %v481 = vadd.f32 %v264, %v480
        %v482 = vpop.f32.mrb[0].mxu0
        %v483 = vadd.f32 %v264, %v482
        %484 = vdwg.mxu0
        %v485 = vmax.f32 %v374, 0.0
        %v486 = vmax.f32 %v376, 0.0
        %v487 = vmax.f32 %v447, 0.0
        %v488 = vmax.f32 %v449, 0.0
        %v489 = vmax.f32 %v378, 0.0
        %v490 = vmax.f32 %v380, 0.0
        %v491 = vmax.f32 %v451, 0.0
        %v492 = vmax.f32 %v453, 0.0
        %v493 = vmax.f32 %v384, 0.0
        %v494 = vmax.f32 %v386, 0.0
        %v495 = vmax.f32 %v457, 0.0
        %v496 = vmax.f32 %v459, 0.0
        %v497 = vmax.f32 %v388, 0.0
        %v498 = vmax.f32 %v390, 0.0
        %v499 = vmax.f32 %v461, 0.0
        %v500 = vmax.f32 %v463, 0.0
        %v501 = vmax.f32 %v394, 0.0
        %v502 = vmax.f32 %v396, 0.0
        %v503 = vmax.f32 %v467, 0.0
        %v504 = vmax.f32 %v469, 0.0
        %v505 = vmax.f32 %v398, 0.0
        %v506 = vmax.f32 %v400, 0.0
        %v507 = vmax.f32 %v471, 0.0
        %v508 = vmax.f32 %v473, 0.0
        %v509 = vmax.f32 %v404, 0.0
        %v510 = vmax.f32 %v406, 0.0
        %v511 = vmax.f32 %v477, 0.0
        %v512 = vmax.f32 %v479, 0.0
        %v513 = vmax.f32 %v408, 0.0
        %v514 = vmax.f32 %v410, 0.0
        %v515 = vmax.f32 %v481, 0.0
        %v516 = vmax.f32 %v483, 0.0
        %517 = vst [vmem:[%s198] sm:$0xff] %v485
        %518 = vst [vmem:[%s198 + $0x8] sm:$0xff] %v486
        %519 = vst [vmem:[%s198 + $0x10] sm:$0xff] %v487
        %520 = vst [vmem:[%s198 + $0x18] sm:$0xff] %v488
        %521 = vst [vmem:[%s198 + $0x20] sm:$0xff] %v489
        %522 = vst [vmem:[%s198 + $0x28] sm:$0xff] %v490
        %523 = vst [vmem:[%s198 + $0x30] sm:$0xff] %v491
        %524 = vst [vmem:[%s198 + $0x38] sm:$0xff] %v492
        %525 = vst [vmem:[%s198 + $0x40] sm:$0xff] %v493
        %526 = vst [vmem:[%s198 + $0x48] sm:$0xff] %v494
        %527 = vst [vmem:[%s198 + $0x50] sm:$0xff] %v495
        %528 = vst [vmem:[%s198 + $0x58] sm:$0xff] %v496
        %529 = vst [vmem:[%s198 + $0x60] sm:$0xff] %v497
        %530 = vst [vmem:[%s198 + $0x68] sm:$0xff] %v498
        %531 = vst [vmem:[%s198 + $0x70] sm:$0xff] %v499
        %532 = vst [vmem:[%s198 + $0x78] sm:$0xff] %v500
        %533 = vst [vmem:[%s198 + $0x80] sm:$0xff] %v501
        %534 = vst [vmem:[%s198 + $0x88] sm:$0xff] %v502
        %535 = vst [vmem:[%s198 + $0x90] sm:$0xff] %v503
        %536 = vst [vmem:[%s198 + $0x98] sm:$0xff] %v504
        %537 = vst [vmem:[%s198 + $0xa0] sm:$0xff] %v505
        %538 = vst [vmem:[%s198 + $0xa8] sm:$0xff] %v506
        %539 = vst [vmem:[%s198 + $0xb0] sm:$0xff] %v507
        %540 = vst [vmem:[%s198 + $0xb8] sm:$0xff] %v508
        %541 = vst [vmem:[%s198 + $0xc0] sm:$0xff] %v509
        %542 = vst [vmem:[%s198 + $0xc8] sm:$0xff] %v510
        %543 = vst [vmem:[%s198 + $0xd0] sm:$0xff] %v511
        %544 = vst [vmem:[%s198 + $0xd8] sm:$0xff] %v512
        %545 = vst [vmem:[%s198 + $0xe0] sm:$0xff] %v513
        %546 = vst [vmem:[%s198 + $0xe8] sm:$0xff] %v514
        %547 = vst [vmem:[%s198 + $0xf0] sm:$0xff] %v515
        %548 = vst [vmem:[%s198 + $0xf8] sm:$0xff] %v516
        %s549 = sand.u32 %s90, 1
        %s550 = sand.u32 %s90, 1
        %s551 = smul.addr %s550, 256
        %s552 = scalar_lea.vmem [#allocation3], %s551
        // Predicated region
        $region56: #{block_transpose_forward.1} parent=50 // pred_check
          %p553 = pneg %p100
        $region57: #{block_transpose_forward.1} parent=50 // pred_check_branch
          %555 = sbr.rel (%p553) target = $region59
        $region58: #{block_transpose_forward.1} parent=50 // pred_region
          %s556 = smul.u32 4, %s14
          %s557 = smul.addr %s556, 8
          %s558 = scalar_lea.vmem %s3, %s557
          // Predicated region
          $region60: #{block_transpose_forward.1} parent=58 // pred_check
            _
          $region61: #{block_transpose_forward.1} parent=58 // pred_check_branch
            %560 = sbr.rel (0) target = $region63
          $region62: #{block_transpose_forward.1} parent=58 // pred_region
            // Predicated region
            $region64: #{block_transpose_forward.1} parent=62 // pred_check
              _
            $region65: #{block_transpose_forward.1} parent=62 // pred_check_branch
              %562 = sbr.rel (0) target = $region67
            $region66: #{block_transpose_forward.1} parent=62 // pred_region
              loop: start=0, step=1, limit=1
              $region68: #{block_transpose_forward.1} parent=66 // loop_pre_header
                _
              $region69: #{block_transpose_forward.1} parent=66 // loop_header
                %s564 = sphi 0, %s568
                %p565 = scmp.ge.s32.totalorder %s564, 1
                %s569 = sphi %s552, %s552
                %s570 = sphi %s558, %s558
              $region70: #{block_transpose_forward.1} parent=66 // loop_header_branch
                %567 = sbr.rel (%p565) target = $region74
              $region71: #{block_transpose_forward.1} parent=66 // loop_body
                %v571 = vld [vmem:[%s569] sm:$0xff]
                %572 = vst [vmem:[%s570] sm:$0xff] %v571
                %v573 = vld [vmem:[%s569 + $0x8] sm:$0xff]
                %574 = vst [vmem:[%s570 + $0x8] sm:$0xff] %v573
                %v575 = vld [vmem:[%s569 + $0x10] sm:$0xff]
                %576 = vst [vmem:[%s570 + $0x10] sm:$0xff] %v575
                %v577 = vld [vmem:[%s569 + $0x18] sm:$0xff]
                %578 = vst [vmem:[%s570 + $0x18] sm:$0xff] %v577
                %v579 = vld [vmem:[%s569 + $0x20] sm:$0xff]
                %580 = vst [vmem:[%s570 + $0x40] sm:$0xff] %v579
                %v581 = vld [vmem:[%s569 + $0x28] sm:$0xff]
                %582 = vst [vmem:[%s570 + $0x48] sm:$0xff] %v581
                %v583 = vld [vmem:[%s569 + $0x30] sm:$0xff]
                %584 = vst [vmem:[%s570 + $0x50] sm:$0xff] %v583
                %v585 = vld [vmem:[%s569 + $0x38] sm:$0xff]
                %586 = vst [vmem:[%s570 + $0x58] sm:$0xff] %v585
                %v587 = vld [vmem:[%s569 + $0x40] sm:$0xff]
                %588 = vst [vmem:[%s570 + $0x80] sm:$0xff] %v587
                %v589 = vld [vmem:[%s569 + $0x48] sm:$0xff]
                %590 = vst [vmem:[%s570 + $0x88] sm:$0xff] %v589
                %v591 = vld [vmem:[%s569 + $0x50] sm:$0xff]
                %592 = vst [vmem:[%s570 + $0x90] sm:$0xff] %v591
                %v593 = vld [vmem:[%s569 + $0x58] sm:$0xff]
                %594 = vst [vmem:[%s570 + $0x98] sm:$0xff] %v593
                %v595 = vld [vmem:[%s569 + $0x60] sm:$0xff]
                %596 = vst [vmem:[%s570 + $0xc0] sm:$0xff] %v595
                %v597 = vld [vmem:[%s569 + $0x68] sm:$0xff]
                %598 = vst [vmem:[%s570 + $0xc8] sm:$0xff] %v597
                %v599 = vld [vmem:[%s569 + $0x70] sm:$0xff]
                %600 = vst [vmem:[%s570 + $0xd0] sm:$0xff] %v599
                %v601 = vld [vmem:[%s569 + $0x78] sm:$0xff]
                %602 = vst [vmem:[%s570 + $0xd8] sm:$0xff] %v601
                %v603 = vld [vmem:[%s569 + $0x80] sm:$0xff]
                %604 = vst [vmem:[%s570 + $0x100] sm:$0xff] %v603
                %v605 = vld [vmem:[%s569 + $0x88] sm:$0xff]
                %606 = vst [vmem:[%s570 + $0x108] sm:$0xff] %v605
                %v607 = vld [vmem:[%s569 + $0x90] sm:$0xff]
                %608 = vst [vmem:[%s570 + $0x110] sm:$0xff] %v607
                %v609 = vld [vmem:[%s569 + $0x98] sm:$0xff]
                %610 = vst [vmem:[%s570 + $0x118] sm:$0xff] %v609
                %v611 = vld [vmem:[%s569 + $0xa0] sm:$0xff]
                %612 = vst [vmem:[%s570 + $0x140] sm:$0xff] %v611
                %v613 = vld [vmem:[%s569 + $0xa8] sm:$0xff]
                %614 = vst [vmem:[%s570 + $0x148] sm:$0xff] %v613
                %v615 = vld [vmem:[%s569 + $0xb0] sm:$0xff]
                %616 = vst [vmem:[%s570 + $0x150] sm:$0xff] %v615
                %v617 = vld [vmem:[%s569 + $0xb8] sm:$0xff]
                %618 = vst [vmem:[%s570 + $0x158] sm:$0xff] %v617
                %v619 = vld [vmem:[%s569 + $0xc0] sm:$0xff]
                %620 = vst [vmem:[%s570 + $0x180] sm:$0xff] %v619
                %v621 = vld [vmem:[%s569 + $0xc8] sm:$0xff]
                %622 = vst [vmem:[%s570 + $0x188] sm:$0xff] %v621
                %v623 = vld [vmem:[%s569 + $0xd0] sm:$0xff]
                %624 = vst [vmem:[%s570 + $0x190] sm:$0xff] %v623
                %v625 = vld [vmem:[%s569 + $0xd8] sm:$0xff]
                %626 = vst [vmem:[%s570 + $0x198] sm:$0xff] %v625
                %v627 = vld [vmem:[%s569 + $0xe0] sm:$0xff]
                %628 = vst [vmem:[%s570 + $0x1c0] sm:$0xff] %v627
                %v629 = vld [vmem:[%s569 + $0xe8] sm:$0xff]
                %630 = vst [vmem:[%s570 + $0x1c8] sm:$0xff] %v629
                %v631 = vld [vmem:[%s569 + $0xf0] sm:$0xff]
                %632 = vst [vmem:[%s570 + $0x1d0] sm:$0xff] %v631
                %v633 = vld [vmem:[%s569 + $0xf8] sm:$0xff]
                %634 = vst [vmem:[%s570 + $0x1d8] sm:$0xff] %v633
              $region72: #{block_transpose_forward.1} parent=66 // loop_footer
                %s568 = sadd.s32 1, %s564
              $region73: #{block_transpose_forward.1} parent=66 // loop_footer_branch
                %563 = sbr.rel target = $region69
              $region74: #{block_transpose_forward.1} parent=66 // loop_exit
                _
            $region67: #{block_transpose_forward.1} parent=62 // pred_fallthru
              _
            // Predicated region
            $region75: #{block_transpose_forward.1} parent=62 // pred_check
              _
            $region76: #{block_transpose_forward.1} parent=62 // pred_check_branch
              %636 = sbr.rel target = $region78
            $region77: #{block_transpose_forward.1} parent=62 // pred_region
              _
            $region78: #{block_transpose_forward.1} parent=62 // pred_fallthru
              _
          $region63: #{block_transpose_forward.1} parent=58 // pred_fallthru
            _
          %637 = vnop
        $region59: #{block_transpose_forward.1} parent=50 // pred_fallthru
          _
      $region51: #{block_transpose_forward.1} parent=5 // pred_fallthru
        _
      %p638 = scmp.le.s32.totalorder 2, %s9
      // Predicated region
      $region79: #{block_transpose_forward.1} parent=5 // pred_check
        %p639 = pneg %p638
      $region80: #{block_transpose_forward.1} parent=5 // pred_check_branch
        %641 = sbr.rel (%p639) target = $region82
      $region81: #{block_transpose_forward.1} parent=5 // pred_region
        %s642 = ssub.s32 %s9, 2
        // Predicated region
        $region83: #{block_transpose_forward.1} parent=81 // pred_check
          %p643 = pneg %p106
        $region84: #{block_transpose_forward.1} parent=81 // pred_check_branch
          %645 = sbr.rel (%p643) target = $region86
        $region85: #{block_transpose_forward.1} parent=81 // pred_region
          %s646 = sand.u32 %s91, 1
          %s647 = sand.u32 %s91, 1
          %s648 = smul.addr %s647, 256
          %s649 = scalar_lea.vmem [#allocation3], %s648
        $region86: #{block_transpose_forward.1} parent=81 // pred_fallthru
          _
      $region82: #{block_transpose_forward.1} parent=5 // pred_fallthru
        _
    $region6: #{block_transpose_forward.1} parent=1 // loop_footer
      %s13 = sadd.s32 1, %s9
    $region7: #{block_transpose_forward.1} parent=1 // loop_footer_branch
      %8 = sbr.rel target = $region3
    $region8: #{block_transpose_forward.1} parent=1 // loop_exit
      _

</llo_original>
